<compile_context>
chip_gen: v7x
topology: tpu7x:2x2x1
jax: 0.10.0
libtpu: 0.0.40
codegen_flags: <defaults>
</compile_context>

<pallas_src>
import functools

import jax
import jax.numpy as jnp
from jax.experimental import pallas as pl
from jax.experimental.pallas import tpu as pltpu


def _focal_loss_kernel(preds_ref, targets_ref, out_ref, *, alpha, gamma):
    x = preds_ref[...].astype(jnp.float32)      # [T, C]
    t = targets_ref[...].astype(jnp.float32)    # [T, C]

    # Numerically stable logsumexp over the class (lane) axis.
    m = jnp.max(x, axis=-1, keepdims=True)                       # [T, 1]
    z = x - m                                                    # [T, C]
    lse = jnp.log(jnp.sum(jnp.exp(z), axis=-1, keepdims=True))   # [T, 1]

    # ce = -sum(t * (z - lse)) = sum(t) * lse - sum(t * z)
    # (exact algebraic identity; avoids materializing logp over the tile)
    t_sum = jnp.sum(t, axis=-1, keepdims=True)                   # [T, 1]
    tz = jnp.sum(t * z, axis=-1, keepdims=True)                  # [T, 1]
    ce = t_sum * lse - tz                                        # [T, 1]

    pt = jnp.exp(-ce)
    one_minus_pt = 1.0 - pt

    # Focusing weight (1 - pt)^gamma.
    if float(gamma) == int(gamma) and int(gamma) >= 0:
        # Integer power -> plain VPU multiplies (no transcendentals, no NaN
        # hazard from log of a tiny negative argument).
        w = jnp.ones_like(one_minus_pt)
        for _ in range(int(gamma)):
            w = w * one_minus_pt
    else:
        w = jnp.power(jnp.maximum(one_minus_pt, 0.0), float(gamma))

    focal = w * ce
    if alpha is not None:
        focal = jnp.float32(alpha) * focal

    out_ref[...] = focal                                         # [T, 1]


def _round_up(x, m):
    return ((x + m - 1) // m) * m


def _choose_tile_n(n, c, in_itemsize):
    """Pick a row-tile size that keeps pipelined VMEM use well under budget."""
    n8 = _round_up(max(n, 1), 8)
    # 2 inputs x 2 pipeline buffers (input dtype) + ~4 f32-sized temporaries.
    per_row_bytes = max(1, c * (4 * in_itemsize + 4 * 4))
    budget = 24 * 1024 * 1024  # safe on v7x (64 MiB VMEM) and v5e/v6e (128 MiB)
    t = budget // per_row_bytes
    t = int(max(8, min(t, 1024, n8)))
    return (t // 8) * 8


def focal_loss(preds, targets, alpha=0.2, gamma=2, reduction="mean", tile_n=None):
    """Focal loss computed with a row-tiled Pallas TPU kernel.

    preds, targets: [N, C] arrays (any float dtype; math is done in f32).
    """
    assert preds.shape == targets.shape and preds.ndim == 2
    n, c = preds.shape

    if tile_n is None:
        tile_n = _choose_tile_n(n, c, jnp.dtype(preds.dtype).itemsize)
    tile_n = max(8, (int(tile_n) // 8) * 8)

    grid = (pl.cdiv(n, tile_n),)

    kernel = functools.partial(
        _focal_loss_kernel,
        alpha=None if alpha is None else float(alpha),
        gamma=gamma,
    )

    per_row = pl.pallas_call(
        kernel,
        out_shape=jax.ShapeDtypeStruct((n, 1), jnp.float32),
        grid=grid,
        in_specs=[
            pl.BlockSpec((tile_n, c), lambda i: (i, 0)),
            pl.BlockSpec((tile_n, c), lambda i: (i, 0)),
        ],
        out_specs=pl.BlockSpec((tile_n, 1), lambda i: (i, 0)),
        compiler_params=pltpu.CompilerParams(
            dimension_semantics=("parallel",),
            vmem_limit_bytes=64 * 1024 * 1024,
        ),
    )(preds, targets)

    per_row = per_row[:, 0]
    if reduction == "mean":
        return jnp.mean(per_row)
    elif reduction == "sum":
        return jnp.sum(per_row)
    else:  # 'none'
        return per_row


def _reference_focal_loss(preds, targets, alpha=0.2, gamma=2):
    logp = jax.nn.log_softmax(preds.astype(jnp.float32), axis=-1)
    ce = -jnp.sum(targets.astype(jnp.float32) * logp, axis=-1)
    pt = jnp.exp(-ce)
    return jnp.mean(alpha * (1.0 - pt) ** gamma * ce)


if __name__ == "__main__":
    key = jax.random.PRNGKey(0)
    k1, k2 = jax.random.split(key)

    # Case 1: one-hot targets, N not a multiple of 8 (exercises block padding).
    N, C = 10, 128
    preds = jax.random.normal(k1, (N, C), dtype=jnp.float32)
    labels = jax.random.randint(k2, (N,), 0, C)
    targets = jax.nn.one_hot(labels, C, dtype=jnp.float32)  # targets.float()

    loss = focal_loss(preds, targets, alpha=0.2, gamma=2, reduction="mean")
    loss = jax.block_until_ready(loss)
    ref = _reference_focal_loss(preds, targets, alpha=0.2, gamma=2)
    assert jnp.allclose(loss, ref, rtol=1e-5, atol=1e-5), (loss, ref)

    # Case 2: soft targets, multiple row tiles (grid > 1) with a forced small tile.
    k3, k4 = jax.random.split(k2)
    N2, C2 = 24, 256
    preds2 = jax.random.normal(k3, (N2, C2), dtype=jnp.float32)
    targets2 = jax.nn.softmax(
        jax.random.normal(k4, (N2, C2), dtype=jnp.float32), axis=-1
    )
    loss2 = focal_loss(preds2, targets2, alpha=0.2, gamma=2, reduction="mean",
                       tile_n=8)
    loss2 = jax.block_until_ready(loss2)
    ref2 = _reference_focal_loss(preds2, targets2, alpha=0.2, gamma=2)
    assert jnp.allclose(loss2, ref2, rtol=1e-5, atol=1e-5), (loss2, ref2)

    print("KERNEL_OK")
</pallas_src>

<mosaic_0001>
module attributes {stable_mosaic.version = 11 : i64} {
  func.func @_focal_loss_kernel(%arg0: i32, %arg1: memref<16x128xf32, #tpu.memory_space<vmem>>, %arg2: memref<16x128xf32, #tpu.memory_space<vmem>>, %arg3: memref<16x1xf32, #tpu.memory_space<vmem>>) attributes {dimension_semantics = [#tpu.dimension_semantics<parallel>], iteration_bounds = array<i64: 1>, scalar_prefetch = 0 : i64, scratch_operands = 0 : i64, tpu.core_type = #tpu.core_type<tc>, window_params = [{transform_indices = @transform_0, window_bounds = array<i64: 16, 128>}, {transform_indices = @transform_1, window_bounds = array<i64: 16, 128>}, {transform_indices = @transform_2, window_bounds = array<i64: 16, 1>}]} {
    %c0 = arith.constant 0 : index
    %c0_0 = arith.constant 0 : index
    %0 = vector.load %arg1[%c0, %c0_0] : memref<16x128xf32, #tpu.memory_space<vmem>>, vector<16x128xf32>
    %c0_1 = arith.constant 0 : index
    %c0_2 = arith.constant 0 : index
    %1 = vector.load %arg2[%c0_1, %c0_2] : memref<16x128xf32, #tpu.memory_space<vmem>>, vector<16x128xf32>
    %cst = arith.constant dense<0xFF800000> : vector<16xf32>
    %2 = vector.multi_reduction <maximumf>, %0, %cst [1] : vector<16x128xf32> to vector<16xf32>
    %3 = vector.shape_cast %2 : vector<16xf32> to vector<16x1xf32>
    %4 = vector.broadcast %3 : vector<16x1xf32> to vector<16x128xf32>
    %5 = arith.subf %0, %4 : vector<16x128xf32>
    %6 = math.exp %5 : vector<16x128xf32>
    %cst_3 = arith.constant dense<0.000000e+00> : vector<16xf32>
    %7 = vector.multi_reduction <add>, %6, %cst_3 [1] : vector<16x128xf32> to vector<16xf32>
    %8 = vector.shape_cast %7 : vector<16xf32> to vector<16x1xf32>
    %9 = math.log %8 : vector<16x1xf32>
    %cst_4 = arith.constant dense<0.000000e+00> : vector<16xf32>
    %10 = vector.multi_reduction <add>, %1, %cst_4 [1] : vector<16x128xf32> to vector<16xf32>
    %11 = vector.shape_cast %10 : vector<16xf32> to vector<16x1xf32>
    %12 = arith.mulf %1, %5 : vector<16x128xf32>
    %cst_5 = arith.constant dense<0.000000e+00> : vector<16xf32>
    %13 = vector.multi_reduction <add>, %12, %cst_5 [1] : vector<16x128xf32> to vector<16xf32>
    %14 = vector.shape_cast %13 : vector<16xf32> to vector<16x1xf32>
    %15 = arith.mulf %11, %9 : vector<16x1xf32>
    %16 = arith.subf %15, %14 : vector<16x1xf32>
    %cst_6 = arith.constant 0.000000e+00 : f32
    %17 = vector.broadcast %cst_6 : f32 to vector<16x1xf32>
    %18 = arith.subf %17, %16 : vector<16x1xf32>
    %19 = math.exp %18 : vector<16x1xf32>
    %cst_7 = arith.constant 1.000000e+00 : f32
    %20 = vector.broadcast %cst_7 : f32 to vector<16x1xf32>
    %21 = arith.subf %20, %19 : vector<16x1xf32>
    %cst_8 = arith.constant 1.000000e+00 : f32
    %22 = vector.broadcast %cst_8 : f32 to vector<16x1xf32>
    %23 = arith.mulf %22, %21 : vector<16x1xf32>
    %24 = arith.mulf %23, %21 : vector<16x1xf32>
    %25 = arith.mulf %24, %16 : vector<16x1xf32>
    %cst_9 = arith.constant 2.000000e-01 : f32
    %26 = vector.broadcast %cst_9 : f32 to vector<16x1xf32>
    %27 = arith.mulf %26, %25 : vector<16x1xf32>
    %c0_10 = arith.constant 0 : index
    %c0_11 = arith.constant 0 : index
    %28 = vector.load %arg3[%c0_10, %c0_11] : memref<16x1xf32, #tpu.memory_space<vmem>>, vector<16x1xf32>
    tpu.vector_store %arg3[%c0_10, %c0_11], %27 {strides = array<i32>} : memref<16x1xf32, #tpu.memory_space<vmem>>, vector<16x1xf32>,
    return
  }
  func.func @transform_0(%arg0: i32) -> (i32, i32) {
    %c0_i32 = arith.constant 0 : i32
    %c0_i32_0 = arith.constant 0 : i32
    return %arg0, %c0_i32 : i32, i32
  }
  func.func @transform_1(%arg0: i32) -> (i32, i32) {
    %c0_i32 = arith.constant 0 : i32
    %c0_i32_0 = arith.constant 0 : i32
    return %arg0, %c0_i32 : i32, i32
  }
  func.func @transform_2(%arg0: i32) -> (i32, i32) {
    %c0_i32 = arith.constant 0 : i32
    %c0_i32_0 = arith.constant 0 : i32
    return %arg0, %c0_i32 : i32, i32
  }
}

</mosaic_0001>

<llo_original>
// kernel: tpu_custom_call.1
$region0: #{tpu_custom_call.1}
  #allocation0 [shape = 'u32[]', space=smem, size = 0x4, offset = 0x4, fixed_abs, tag = 'smem constant byte address 0x4 - core index']
  #allocation1 [shape = 'u32[144,128]{1,0:T(1,128)}', space=vmem, size = 0x12000, scoped, tag = 'internal scratch']
  %s0 = inlined_call_operand.hbm [shape: f32[10,128], index: 0, kind: input, shape index: {}]
  %s1 = inlined_call_operand.hbm [shape: f32[10,128], index: 1, kind: input, shape index: {}]
  %s2 = inlined_call_operand.hbm [shape: f32[10,1], index: 2, kind: output, shape index: {}]
  %s3 = sld [smem:[#allocation0]]
  $region26: #{tpu_custom_call.1} parent=0
    _
  %s5 = ssub.s32 1, %s3
  %s6 = scalar_select 0, %s5, %s3
  $region1: #{tpu_custom_call.1} parent=0
    #allocation2 [shape = 'u8[8192]{0}', space=vmem, size = 0x2000, scoped, tag = 'input window, operand 0, single buffered']
    #allocation3 [shape = 's32[1]{0}', space=sflag, size = 0x4, scoped, tag = 'scoped memory for tpu_custom_call.1']
    #allocation4 [shape = 's32[1]{0}', space=sflag, size = 0x4, scoped, tag = 'scoped memory for tpu_custom_call.1']
    #allocation5 [shape = 'u8[8192]{0}', space=vmem, size = 0x2000, scoped, tag = 'input window, operand 1, single buffered']
    #allocation6 [shape = 's32[1]{0}', space=sflag, size = 0x4, scoped, tag = 'scoped memory for tpu_custom_call.1']
    #allocation7 [shape = 'u8[8192]{0}', space=vmem, size = 0x2000, scoped, tag = 'output window, operand 0, single buffered']
    %7 = vsyncpa [#allocation3], 0
    %8 = vsyncpa [#allocation6], 0
    %9 = vsyncpa [#allocation4], 0
    // Predicated region
    $region2: #{tpu_custom_call.1} parent=1 // pred_check
      _
    $region3: #{tpu_custom_call.1} parent=1 // pred_check_branch
      %11 = sbr.rel (0) target = $region5
    $region4: #{tpu_custom_call.1} parent=1 // pred_region
      %s13 = ssub.s32 256, 256
      %14 = vsyncadd [#allocation3], %s13
      %s15 = sshll.u32 [#allocation2], 4
      %s16 = int_to_ptr.vmem [resolvable:$true] %s15
      %21 = dma.hbm_to_vmem [thread:$0]  %s0, 256, %s16, [#allocation3], 128, 128, 8
    $region5: #{tpu_custom_call.1} parent=1 // pred_fallthru
      _
    // Predicated region
    $region6: #{tpu_custom_call.1} parent=1 // pred_check
      _
    $region7: #{tpu_custom_call.1} parent=1 // pred_check_branch
      %23 = sbr.rel (0) target = $region9
    $region8: #{tpu_custom_call.1} parent=1 // pred_region
      %s25 = ssub.s32 256, 256
      %26 = vsyncadd [#allocation6], %s25
      %s27 = sshll.u32 [#allocation5], 4
      %s28 = int_to_ptr.vmem [resolvable:$true] %s27
      %33 = dma.hbm_to_vmem [thread:$0]  %s1, 256, %s28, [#allocation6], 128, 128, 8
    $region9: #{tpu_custom_call.1} parent=1 // pred_fallthru
      _
    // Predicated region
    $region10: #{tpu_custom_call.1} parent=1 // pred_check
      _
    $region11: #{tpu_custom_call.1} parent=1 // pred_check_branch
      %35 = sbr.rel (0) target = $region13
    $region12: #{tpu_custom_call.1} parent=1 // pred_region
      %36 = dma.done [#allocation3], 256
    $region13: #{tpu_custom_call.1} parent=1 // pred_fallthru
      _
    // Predicated region
    $region14: #{tpu_custom_call.1} parent=1 // pred_check
      _
    $region15: #{tpu_custom_call.1} parent=1 // pred_check_branch
      %38 = sbr.rel (0) target = $region17
    $region16: #{tpu_custom_call.1} parent=1 // pred_region
      %39 = dma.done [#allocation6], 256
    $region17: #{tpu_custom_call.1} parent=1 // pred_fallthru
      _
    %v40 = vld [vmem:[#allocation2] sm:$0xff]
    %v41 = vld [vmem:[#allocation2 + $0x8] sm:$0xff]
    %v42 = vld [vmem:[#allocation5] sm:$0xff]
    %v43 = vld [vmem:[#allocation5 + $0x8] sm:$0xff]
    %44 = vmax.xlane.f32.xlu0 %v40
    %v45 = vpop.xlane.xlu0 %44
    %46 = vmax.xlane.f32.xlu0 %v41
    %v47 = vpop.xlane.xlu0 %46
    %v48 = vsub.f32 %v40, %v45
    %v49 = vsub.f32 %v41, %v47
    %v50 = vmul.f32 %v48, 1.442695
    %v51 = vpow.pop %v50
    %v52 = vmul.f32 %v49, 1.442695
    %v53 = vpow.pop %v52
    %54 = vadd.xlane.f32.xlu0 %v51
    %v55 = vpop.xlane.xlu0 %54
    %56 = vadd.xlane.f32.xlu0 %v53
    %v57 = vpop.xlane.xlu0 %56
    %v58 = vlog2.pop %v55
    %v59 = vmul.f32 %v58, 0.6931472
    %v60 = vlog2.pop %v57
    %v61 = vmul.f32 %v60, 0.6931472
    %62 = vadd.xlane.f32.xlu0 %v42
    %v63 = vpop.xlane.xlu0 %62
    %64 = vadd.xlane.f32.xlu0 %v43
    %v65 = vpop.xlane.xlu0 %64
    %v66 = vmul.f32 %v42, %v48
    %v67 = vmul.f32 %v43, %v49
    %68 = vadd.xlane.f32.xlu0 %v66
    %v69 = vpop.xlane.xlu0 %68
    %70 = vadd.xlane.f32.xlu0 %v67
    %v71 = vpop.xlane.xlu0 %70
    %v72 = vmul.f32 %v63, %v59
    %v73 = vmul.f32 %v65, %v61
    %v74 = vsub.f32 %v72, %v69
    %v75 = vsub.f32 %v73, %v71
    %v76 = vsub.f32 0.0, %v74
    %v77 = vsub.f32 0.0, %v75
    %v78 = vmul.f32 %v76, 1.442695
    %v79 = vpow.pop %v78
    %v80 = vmul.f32 %v77, 1.442695
    %v81 = vpow.pop %v80
    %v82 = vsub.f32 1.0, %v79
    %v83 = vsub.f32 1.0, %v81
    %v84 = vmul.f32 %v82, %v82
    %v85 = vmul.f32 %v83, %v83
    %v86 = vmul.f32 %v84, %v74
    %v87 = vmul.f32 %v85, %v75
    %v88 = vmul.f32 %v86, 0.2
    %v89 = vmul.f32 %v87, 0.2
    %vm90 = vcmask 7168
    %91 = vst.msk [vmem:[#allocation7] sm:$0xff] %vm90, %v88
    %92 = vst.msk [vmem:[#allocation7 + $0x8] sm:$0xff] %vm90, %v89
    // Predicated region
    $region18: #{tpu_custom_call.1} parent=1 // pred_check
      _
    $region19: #{tpu_custom_call.1} parent=1 // pred_check_branch
      %94 = sbr.rel (0) target = $region21
    $region20: #{tpu_custom_call.1} parent=1 // pred_region
      %s96 = ssub.s32 256, 256
      %97 = vsyncadd [#allocation4], %s96
      %s98 = sshll.u32 [#allocation7], 4
      %s99 = int_to_ptr.vmem [resolvable:$true] %s98
      %104 = dma.vmem_to_hbm [thread:$0]  %s99, 256, %s2, [#allocation4], 128, 128, 8
    $region21: #{tpu_custom_call.1} parent=1 // pred_fallthru
      _
    // Predicated region
    $region22: #{tpu_custom_call.1} parent=1 // pred_check
      _
    $region23: #{tpu_custom_call.1} parent=1 // pred_check_branch
      %106 = sbr.rel (0) target = $region25
    $region24: #{tpu_custom_call.1} parent=1 // pred_region
      %107 = dma.done [#allocation4], 256
    $region25: #{tpu_custom_call.1} parent=1 // pred_fallthru
      _
    %108 = vsyncpa [#allocation3], 1
    %109 = vsyncpa [#allocation6], 1
    %110 = vsyncpa [#allocation4], 1

</llo_original>
